<compile_context>
chip_gen: v5e
topology: v5e:2x2
jax: 0.10.0
libtpu: 0.0.40
codegen_flags: <defaults>
</compile_context>

<pallas_src>
import jax
import jax.numpy as jnp
from jax.experimental import pallas as pl
from jax.experimental.pallas import tpu as pltpu


def _round_up(x, m):
    return ((x + m - 1) // m) * m


def _vmem_cap_bytes():
    """Generation-aware scoped-VMEM cap: 3/4 of physical, conservative fallback."""
    phys = 64 << 20  # v7x per-TensorCore physical VMEM (smallest of v5e/v6e/v7x)
    try:
        info = pltpu.get_tpu_info()
        reported = int(getattr(info, "vmem_capacity_bytes", 0) or 0)
        if reported > 0:
            phys = reported
    except Exception:  # defensive: interpret mode / API drift
        pass
    return max(32 << 20, (phys * 3) // 4)


def _vmem_budget_bytes(tile_p, gv, ge):
    """Declared scoped-VMEM need: pipelined idx/out blocks (2x each), the
    resident block-diagonal table counted 2x (BlockSpec double-buffers even a
    constant-index_map block), plus iota / compare / one-hot scratch headroom."""
    lane = 128
    idx_buf = 2 * tile_p * lane * 4                            # [TILE_P, G] i32, lane-padded
    out_buf = 2 * tile_p * _round_up(ge, lane) * 4             # [TILE_P, G*E] f32
    tab_buf = 2 * _round_up(gv, 8) * _round_up(ge, lane) * 2   # bf16 table, double-buffered
    scratch = 4 * tile_p * _round_up(gv, lane) * 4             # iota / mask / one-hot
    budget = idx_buf + out_buf + tab_buf + scratch + (4 << 20)
    return int(min(max(budget, 16 << 20), _vmem_cap_bytes()))


def _fused_embedding_kernel(idx_ref, table_ref, out_ref):
    """Lane-dense gather of G packed rows per output row via a one-hot MXU matmul.

    idx_ref:   [TILE_P, G]     int32 -- column g holds an index into block g of
                                        the block-diagonal table
    table_ref: [G*V_pad, G*E]  bf16  -- VMEM-resident block-diagonal table
    out_ref:   [TILE_P, G*E]   f32   -- packed output rows (G*E == 128 lanes)
    """
    idx = idx_ref[...]
    tile_p, group = idx.shape
    gv = table_ref.shape[0]
    # TODO(synk): hoisting `col` into a persistent scratch under
    #             pl.when(program_id==0) is unsafe with "parallel" semantics
    #             (core 1 never runs step 0); only worth revisiting if VALU
    #             becomes the binding slot at large V_pad.
    col = jax.lax.broadcasted_iota(jnp.int32, (tile_p, gv), 1)
    # Indices in column g live in [g*V_pad, (g+1)*V_pad), so the G compares can
    # never collide and their sum is an exact {0,1} bf16 one-hot selector.
    one_hot = jnp.zeros((tile_p, gv), dtype=table_ref.dtype)
    for g in range(group):                      # static unroll, G is tiny
        one_hot = one_hot + (col == idx[:, g][:, None]).astype(table_ref.dtype)
    out_ref[...] = jnp.dot(
        one_hot, table_ref[...], preferred_element_type=jnp.float32
    ).astype(out_ref.dtype)


def fused_embedding_lookup(indices_flat, table_bd, *, group, v_pad, tile_rows=2048):
    """indices_flat: [N] int32 indices into the stacked (pre-block-diag) table.
    table_bd: [G*V_pad, G*E] bf16 block-diagonal table.  Returns [N, E] f32."""
    n = int(indices_flat.shape[0])
    gv, ge = table_bd.shape
    emb = ge // group

    n_packed = -(-n // group)                         # packed rows (G indices each)
    tile_p = max(8, min(max(tile_rows // group, 8), _round_up(n_packed, 8)))
    tile_p = _round_up(tile_p, 8)
    if n_packed > 8:
        # Keep >= 2 grid steps so the "parallel" axis shards across both
        # TensorCores on v7x.
        tile_p = min(tile_p, _round_up(-(-n_packed // 2), 8))
    n_packed_pad = _round_up(n_packed, tile_p)
    n_pad = n_packed_pad * group

    idx = jnp.pad(indices_flat.astype(jnp.int32), (0, n_pad - n))
    idx = idx.reshape(n_packed_pad, group)
    idx = idx + (jnp.arange(group, dtype=jnp.int32) * v_pad)[None, :]

    grid = (n_packed_pad // tile_p,)
    cost = pl.CostEstimate(
        flops=2 * n_packed_pad * gv * ge,
        transcendentals=0,
        bytes_accessed=(n_packed_pad * group * 4
                        + gv * ge * table_bd.dtype.itemsize
                        + n_packed_pad * ge * 4),
    )

    out = pl.pallas_call(
        _fused_embedding_kernel,
        out_shape=jax.ShapeDtypeStruct((n_packed_pad, ge), jnp.float32),
        grid=grid,
        in_specs=[
            pl.BlockSpec((tile_p, group), lambda i: (i, 0)),   # pipelined row tiles
            pl.BlockSpec((gv, ge), lambda i: (0, 0)),          # resident block-diag table
        ],
        out_specs=pl.BlockSpec((tile_p, ge), lambda i: (i, 0)),
        compiler_params=pltpu.CompilerParams(
            dimension_semantics=("parallel",),                 # 2-TC sharding on v7x
            vmem_limit_bytes=_vmem_budget_bytes(tile_p, gv, ge),
        ),
        cost_estimate=cost,
    )(idx, table_bd)

    # Unpack [N_packed_pad, G*E] -> [N_pad, E] and drop the padded tail.
    return out.reshape(n_packed_pad * group, emb)[:n]


class InputEventEmbeddingPallas:
    """JAX/Pallas port of pytrial InputEventEmbedding (fused forward)."""

    def __init__(self, orders, vocab_size, emb_size, padding_idx, seed=0):
        self.orders = list(orders)
        self.vocab_size = list(vocab_size)
        self.emb_size = emb_size
        self.padding_idx = padding_idx

        key = jax.random.PRNGKey(seed)
        self.tables = {}
        self.offsets = {}
        parts = []
        off = 0
        for i, order in enumerate(self.orders):
            key, sub = jax.random.split(key)
            # nn.Embedding default init ~ N(0, 1); deterministic synthetic weights.
            w = jax.random.normal(sub, (vocab_size[i], emb_size), dtype=jnp.float32)
            if padding_idx is not None:
                w = w.at[padding_idx].set(0.0)     # nn.Embedding zeros the padding row
            w = w.astype(jnp.bfloat16)             # bf16 weights -> native MXU path
            self.tables[order] = w
            parts.append(w)
            self.offsets[order] = off
            off += vocab_size[i]

        v_total = off
        self.v_pad = _round_up(max(v_total, 8), 128)
        stacked = jnp.concatenate(parts, axis=0)
        stacked = jnp.pad(stacked, ((0, self.v_pad - v_total), (0, 0)))
        self.stacked_table = stacked               # [V_pad, E] bf16 (reference use)

        # Lane-dense packing: G consecutive output rows share one 128-lane row.
        if emb_size <= 128 and 128 % emb_size == 0:
            self.group = 128 // emb_size
        else:
            self.group = 1                          # graceful fallback (masked stores)
        ge = self.group * emb_size
        bd = jnp.zeros((self.group * self.v_pad, ge), jnp.bfloat16)
        for g in range(self.group):
            bd = bd.at[g * self.v_pad:(g + 1) * self.v_pad,
                       g * emb_size:(g + 1) * emb_size].set(stacked)
        self.table_bd = bd                          # [G*V_pad, G*E] bf16

    def __call__(self, inputs):
        # Offset each order's indices into the stacked table and concatenate
        # along the event axis (tiny int concat); the single fused kernel then
        # writes the pre-concatenated [B, sum(L_k), E] result.
        idx_list = []
        batch = None
        for k, v in inputs["v"].items():
            v = jnp.asarray(v, jnp.int32)
            batch = v.shape[0]
            idx_list.append(v + self.offsets[k])
        idx_cat = jnp.concatenate(idx_list, axis=1)            # [B, total_L]
        total_l = idx_cat.shape[1]
        flat = idx_cat.reshape(batch * total_l)
        out = fused_embedding_lookup(flat, self.table_bd,
                                     group=self.group, v_pad=self.v_pad)
        return out.reshape(batch, total_l, self.emb_size)


if __name__ == "__main__":
    # Small synthetic config consistent with the module.
    orders = ["diagnosis", "medication", "procedure"]
    vocab_size = [32, 24, 40]
    emb_size = 32
    padding_idx = 0
    batch = 2
    events_per_order = 8

    model = InputEventEmbeddingPallas(orders, vocab_size, emb_size, padding_idx)

    key = jax.random.PRNGKey(0)
    inputs = {"v": {}}
    for i, order in enumerate(orders):
        key, sub = jax.random.split(key)
        idx = jax.random.randint(
            sub, (batch, events_per_order), 0, vocab_size[i], dtype=jnp.int32
        )
        idx = idx.at[:, -1].set(padding_idx)   # force some padding positions
        inputs["v"][order] = idx

    out = jax.block_until_ready(model(inputs))

    # Reference: per-table gather + concat (PyTorch semantics, bf16 weights).
    ref = jnp.concatenate(
        [model.tables[k][inputs["v"][k]] for k in orders], axis=1
    ).astype(jnp.float32)
    total_events = events_per_order * len(orders)
    assert out.shape == (batch, total_events, emb_size), out.shape
    assert out.dtype == jnp.float32
    assert jnp.allclose(out, ref, atol=1e-6), "mismatch vs reference gather"
    # padding positions must embed to zeros
    assert jnp.allclose(out[:, events_per_order - 1, :], 0.0)

    # Secondary check: exercise multi-tile grid, tail padding and the megacore
    # tile clamp with a larger flat index batch.
    key, sub = jax.random.split(key)
    n_big = 200
    big_idx = jax.random.randint(sub, (n_big,), 0, sum(vocab_size), dtype=jnp.int32)
    big_out = jax.block_until_ready(
        fused_embedding_lookup(big_idx, model.table_bd,
                               group=model.group, v_pad=model.v_pad, tile_rows=64)
    )
    big_ref = model.stacked_table[big_idx].astype(jnp.float32)
    assert big_out.shape == (n_big, emb_size)
    assert jnp.allclose(big_out, big_ref, atol=1e-6), "multi-tile mismatch"

    print("KERNEL_OK")
</pallas_src>

<mosaic_0001>
module attributes {stable_mosaic.version = 11 : i64} {
  func.func @_fused_embedding_kernel(%arg0: i32, %arg1: memref<8x4xi32, #tpu.memory_space<vmem>>, %arg2: memref<512x128xbf16, #tpu.memory_space<vmem>>, %arg3: memref<8x128xf32, #tpu.memory_space<vmem>>) attributes {dimension_semantics = [#tpu.dimension_semantics<parallel>], iteration_bounds = array<i64: 2>, scalar_prefetch = 0 : i64, scratch_operands = 0 : i64, tpu.core_type = #tpu.core_type<tc>, window_params = [{transform_indices = @transform_0, window_bounds = array<i64: 8, 4>}, {pipeline_mode = #tpu.pipeline_mode<synchronous>, transform_indices = @transform_1, window_bounds = array<i64: 512, 128>}, {transform_indices = @transform_2, window_bounds = array<i64: 8, 128>}]} {
    %c0 = arith.constant 0 : index
    %c0_0 = arith.constant 0 : index
    %0 = vector.load %arg1[%c0, %c0_0] : memref<8x4xi32, #tpu.memory_space<vmem>>, vector<8x4xi32>
    %1 = tpu.iota {dimensions = array<i32: 1>} : vector<8x512xi32>
    %cst = arith.constant 0.000000e+00 : bf16
    %2 = vector.broadcast %cst : bf16 to vector<8x512xbf16>
    %3 = vector.extract_strided_slice %0 {offsets = [0, 0], sizes = [8, 1], strides = [1, 1]} : vector<8x4xi32> to vector<8x1xi32>
    %4 = vector.shape_cast %3 : vector<8x1xi32> to vector<8xi32>
    %5 = vector.shape_cast %4 : vector<8xi32> to vector<8x1xi32>
    %6 = vector.broadcast %5 : vector<8x1xi32> to vector<8x512xi32>
    %7 = arith.cmpi eq, %1, %6 : vector<8x512xi32>
    %8 = arith.extui %7 : vector<8x512xi1> to vector<8x512xi32>
    %9 = arith.sitofp %8 : vector<8x512xi32> to vector<8x512xf32>
    %10 = arith.truncf %9 : vector<8x512xf32> to vector<8x512xbf16>
    %11 = arith.addf %2, %10 : vector<8x512xbf16>
    %12 = vector.extract_strided_slice %0 {offsets = [0, 1], sizes = [8, 1], strides = [1, 1]} : vector<8x4xi32> to vector<8x1xi32>
    %13 = vector.shape_cast %12 : vector<8x1xi32> to vector<8xi32>
    %14 = vector.shape_cast %13 : vector<8xi32> to vector<8x1xi32>
    %15 = vector.broadcast %14 : vector<8x1xi32> to vector<8x512xi32>
    %16 = arith.cmpi eq, %1, %15 : vector<8x512xi32>
    %17 = arith.extui %16 : vector<8x512xi1> to vector<8x512xi32>
    %18 = arith.sitofp %17 : vector<8x512xi32> to vector<8x512xf32>
    %19 = arith.truncf %18 : vector<8x512xf32> to vector<8x512xbf16>
    %20 = arith.addf %11, %19 : vector<8x512xbf16>
    %21 = vector.extract_strided_slice %0 {offsets = [0, 2], sizes = [8, 1], strides = [1, 1]} : vector<8x4xi32> to vector<8x1xi32>
    %22 = vector.shape_cast %21 : vector<8x1xi32> to vector<8xi32>
    %23 = vector.shape_cast %22 : vector<8xi32> to vector<8x1xi32>
    %24 = vector.broadcast %23 : vector<8x1xi32> to vector<8x512xi32>
    %25 = arith.cmpi eq, %1, %24 : vector<8x512xi32>
    %26 = arith.extui %25 : vector<8x512xi1> to vector<8x512xi32>
    %27 = arith.sitofp %26 : vector<8x512xi32> to vector<8x512xf32>
    %28 = arith.truncf %27 : vector<8x512xf32> to vector<8x512xbf16>
    %29 = arith.addf %20, %28 : vector<8x512xbf16>
    %30 = vector.extract_strided_slice %0 {offsets = [0, 3], sizes = [8, 1], strides = [1, 1]} : vector<8x4xi32> to vector<8x1xi32>
    %31 = vector.shape_cast %30 : vector<8x1xi32> to vector<8xi32>
    %32 = vector.shape_cast %31 : vector<8xi32> to vector<8x1xi32>
    %33 = vector.broadcast %32 : vector<8x1xi32> to vector<8x512xi32>
    %34 = arith.cmpi eq, %1, %33 : vector<8x512xi32>
    %35 = arith.extui %34 : vector<8x512xi1> to vector<8x512xi32>
    %36 = arith.sitofp %35 : vector<8x512xi32> to vector<8x512xf32>
    %37 = arith.truncf %36 : vector<8x512xf32> to vector<8x512xbf16>
    %38 = arith.addf %29, %37 : vector<8x512xbf16>
    %c0_1 = arith.constant 0 : index
    %c0_2 = arith.constant 0 : index
    %39 = vector.load %arg2[%c0_1, %c0_2] : memref<512x128xbf16, #tpu.memory_space<vmem>>, vector<512x128xbf16>
    %cst_3 = arith.constant dense<0.000000e+00> : vector<8x128xf32>
    %40 = tpu.matmul %38, %39, %cst_3 {dimension_numbers = #tpu.dot_dimension_numbers<[1], [0], [0], [1], [0, 0, 1, 1], [], []>} : vector<8x512xbf16>, vector<512x128xbf16>, vector<8x128xf32> -> vector<8x128xf32>
    %c0_4 = arith.constant 0 : index
    %c0_5 = arith.constant 0 : index
    %41 = vector.load %arg3[%c0_4, %c0_5] : memref<8x128xf32, #tpu.memory_space<vmem>>, vector<8x128xf32>
    tpu.vector_store %arg3[%c0_4, %c0_5], %40 {strides = array<i32>} : memref<8x128xf32, #tpu.memory_space<vmem>>, vector<8x128xf32>,
    return
  }
  func.func @transform_0(%arg0: i32) -> (i32, i32) {
    %c0_i32 = arith.constant 0 : i32
    %c0_i32_0 = arith.constant 0 : i32
    return %arg0, %c0_i32 : i32, i32
  }
  func.func @transform_1(%arg0: i32) -> (i32, i32) {
    %c0_i32 = arith.constant 0 : i32
    %c0_i32_0 = arith.constant 0 : i32
    %c0_i32_1 = arith.constant 0 : i32
    return %c0_i32, %c0_i32_0 : i32, i32
  }
  func.func @transform_2(%arg0: i32) -> (i32, i32) {
    %c0_i32 = arith.constant 0 : i32
    %c0_i32_0 = arith.constant 0 : i32
    return %arg0, %c0_i32 : i32, i32
  }
}

</mosaic_0001>

<llo_original>
// kernel: tpu_custom_call.1
$region0: #{tpu_custom_call.1}
  #allocation0 [shape = 'u32[]', space=smem, size = 0x4, offset = 0x4, fixed_abs, tag = 'smem constant byte address 0x4 - core index']
  #allocation1 [shape = 'u32[72,128]{1,0:T(1,128)}', space=vmem, size = 0x9000, scoped, tag = 'internal scratch']
  %s0 = inlined_call_operand.vmem [shape: s32[16,4], index: 0, kind: input, shape index: {}]
  %s1 = inlined_call_operand.hbm [shape: bf16[512,128], index: 1, kind: input, shape index: {}]
  %s2 = inlined_call_operand.hbm [shape: f32[16,128], index: 2, kind: output, shape index: {}]
  %s3 = sld [smem:[#allocation0]]
  $region45: #{tpu_custom_call.1} parent=0
    _
  %s5 = ssub.s32 1, %s3
  %s6 = scalar_select 0, %s5, %s3
  $region1: #{tpu_custom_call.1} parent=0
    #allocation2 [shape = 'u8[131072]{0}', space=vmem, size = 0x20000, scoped, tag = 'input window, operand 1, single buffered']
    #allocation3 [shape = 's32[2]{0}', space=sflag, size = 0x8, scoped, tag = 'scoped memory for tpu_custom_call.1']
    #allocation4 [shape = 's32[2]{0}', space=sflag, size = 0x8, scoped, tag = 'scoped memory for tpu_custom_call.1']
    #allocation5 [shape = 'u8[8192]{0}', space=vmem, size = 0x2000, scoped, tag = 'output window, operand 0']
    %7 = vsyncpa [#allocation3], 0
    %8 = vsyncpa [#allocation4], 0
    %s9 = scalar_lea.sflag [#allocation4], 1
    %10 = vsyncpa %s9, 0
    loop: start=0, step=1, limit=4
    $region2: #{tpu_custom_call.1} parent=1 // loop_pre_header
      _
    $region3: #{tpu_custom_call.1} parent=1 // loop_header
      %s12 = sphi 0, %s16
      %p13 = scmp.ge.s32.totalorder %s12, 4
      %s22 = sphi 0, %s24
      %s25 = sphi 0, %s22
      %s26 = sphi 0, %s25
      %s42 = sphi 0, %s26
      %s46 = sphi 0, %s46
      %s48 = sphi 0, %s46
      %s49 = sphi 0, %s48
      %s63 = sphi 0, %s49
      %s69 = sphi 0, %s71
      %s72 = sphi 0, %s69
      %s73 = sphi 0, %s72
      %s89 = sphi 0, %s73
    $region4: #{tpu_custom_call.1} parent=1 // loop_header_branch
      %15 = sbr.rel (%p13) target = $region8
    $region5: #{tpu_custom_call.1} parent=1 // loop_body
      %s17 = ssub.s32 %s12, 1
      %s18 = ssub.s32 %s12, 2
      %s19 = sadd.s32 %s12, 1
      %s20 = ssub.s32 %s12, %s19
      %p21 = scmp.eq.s32.totalorder %s20, 0
      %s23 = sadd.s32 %s22, 1
      %s24 = scalar_select %p21, %s22, %s23
      %p27 = pneg %p21
      %p28 = scmp.eq.s32.totalorder %s12, 1
      %p29 = por %p27, %p28
      %p30 = scmp.ne.s32.totalorder %s22, %s25
      %p31 = scmp.eq.s32.totalorder %s12, 0
      %p32 = por %p30, %p31
      %p33 = scmp.ne.s32.totalorder %s22, %s25
      %p34 = scmp.eq.s32.totalorder %s17, 1
      %p35 = por %p33, %p34
      %p36 = scmp.ne.s32.totalorder %s25, %s26
      %p37 = scmp.eq.s32.totalorder %s17, 0
      %p38 = por %p36, %p37
      %p39 = scmp.ne.s32.totalorder %s25, %s26
      %p40 = scmp.eq.s32.totalorder %s18, 1
      %p41 = por %p39, %p40
      %p43 = scmp.ne.s32.totalorder %s26, %s42
      %p44 = scmp.eq.s32.totalorder %s18, 0
      %p45 = por %p43, %p44
      %s47 = sadd.s32 %s46, 1
      %p50 = scmp.eq.s32.totalorder %s12, 1
      %p51 = scmp.ne.s32.totalorder %s46, %s48
      %p52 = scmp.eq.s32.totalorder %s12, 0
      %p53 = por %p51, %p52
      %p54 = scmp.ne.s32.totalorder %s46, %s48
      %p55 = scmp.eq.s32.totalorder %s17, 1
      %p56 = por %p54, %p55
      %p57 = scmp.ne.s32.totalorder %s48, %s49
      %p58 = scmp.eq.s32.totalorder %s17, 0
      %p59 = por %p57, %p58
      %p60 = scmp.ne.s32.totalorder %s48, %s49
      %p61 = scmp.eq.s32.totalorder %s18, 1
      %p62 = por %p60, %p61
      %p64 = scmp.ne.s32.totalorder %s49, %s63
      %p65 = scmp.eq.s32.totalorder %s18, 0
      %p66 = por %p64, %p65
      %s67 = ssub.s32 %s12, %s19
      %p68 = scmp.eq.s32.totalorder %s67, 0
      %s70 = sadd.s32 %s69, 1
      %s71 = scalar_select %p68, %s69, %s70
      %p74 = pneg %p68
      %p75 = scmp.eq.s32.totalorder %s12, 1
      %p76 = por %p74, %p75
      %p77 = scmp.ne.s32.totalorder %s69, %s72
      %p78 = scmp.eq.s32.totalorder %s12, 0
      %p79 = por %p77, %p78
      %p80 = scmp.ne.s32.totalorder %s69, %s72
      %p81 = scmp.eq.s32.totalorder %s17, 1
      %p82 = por %p80, %p81
      %p83 = scmp.ne.s32.totalorder %s72, %s73
      %p84 = scmp.eq.s32.totalorder %s17, 0
      %p85 = por %p83, %p84
      %p86 = scmp.ne.s32.totalorder %s72, %s73
      %p87 = scmp.eq.s32.totalorder %s18, 1
      %p88 = por %p86, %p87
      %p90 = scmp.ne.s32.totalorder %s73, %s89
      %p91 = scmp.eq.s32.totalorder %s18, 0
      %p92 = por %p90, %p91
      %p93 = scmp.le.s32.totalorder 1, %s12
      %p94 = scmp.lt.s32.totalorder %s12, 3
      %p95 = pnand %p93, %p94
      %p96 = pneg %p95
      // Predicated region
      $region9: #{tpu_custom_call.1} parent=5 // pred_check
        _
      $region10: #{tpu_custom_call.1} parent=5 // pred_check_branch
        %98 = sbr.rel (%p95) target = $region12
      $region11: #{tpu_custom_call.1} parent=5 // pred_region
        %s99 = ssub.s32 %s12, 1
        // Predicated region
        $region13: #{tpu_custom_call.1} parent=11 // pred_check
          %p100 = pneg %p59
        $region14: #{tpu_custom_call.1} parent=11 // pred_check_branch
          %102 = sbr.rel (%p100) target = $region16
        $region15: #{tpu_custom_call.1} parent=11 // pred_region
          %104 = vsyncadd [#allocation3], 0
          %s105 = sshll.u32 %s1, 4
          %s106 = int_to_ptr.hbm [resolvable:$true] %s105
          %s107 = sshll.u32 [#allocation2], 4
          %s108 = int_to_ptr.vmem [resolvable:$true] %s107
          %113 = dma.hbm_to_vmem [thread:$0]  %s106, 4096, %s108, [#allocation3], 64, 64, 4
        $region16: #{tpu_custom_call.1} parent=11 // pred_fallthru
          _
      $region12: #{tpu_custom_call.1} parent=5 // pred_fallthru
        _
      %p114 = scmp.lt.s32.totalorder %s12, 2
      // Predicated region
      $region17: #{tpu_custom_call.1} parent=5 // pred_check
        %p115 = pneg %p114
      $region18: #{tpu_custom_call.1} parent=5 // pred_check_branch
        %117 = sbr.rel (%p115) target = $region20
      $region19: #{tpu_custom_call.1} parent=5 // pred_region
        // Predicated region
        $region21: #{tpu_custom_call.1} parent=19 // pred_check
          %p118 = pneg %p32
        $region22: #{tpu_custom_call.1} parent=19 // pred_check_branch
          %120 = sbr.rel (%p118) target = $region24
        $region23: #{tpu_custom_call.1} parent=19 // pred_region
          %p121 = scmp.lt.s32.totalorder %s12, 1
          %s122 = scalar_select %p121, %s12, 1
          %s123 = smul.addr %s122, 8
          %s124 = scalar_lea.vmem %s0, %s123
        $region24: #{tpu_custom_call.1} parent=19 // pred_fallthru
          _
      $region20: #{tpu_custom_call.1} parent=5 // pred_fallthru
        _
      %p125 = scmp.le.s32.totalorder 1, %s12
      %p126 = scmp.lt.s32.totalorder %s12, 3
      %p127 = pnand %p125, %p126
      %p128 = pneg %p127
      // Predicated region
      $region25: #{tpu_custom_call.1} parent=5 // pred_check
        _
      $region26: #{tpu_custom_call.1} parent=5 // pred_check_branch
        %130 = sbr.rel (%p127) target = $region28
      $region27: #{tpu_custom_call.1} parent=5 // pred_region
        %s131 = ssub.s32 %s12, 1
        // Predicated region
        $region29: #{tpu_custom_call.1} parent=27 // pred_check
          %p132 = pneg %p59
        $region30: #{tpu_custom_call.1} parent=27 // pred_check_branch
          %134 = sbr.rel (%p132) target = $region32
        $region31: #{tpu_custom_call.1} parent=27 // pred_region
          %136 = dma.done [#allocation3], 4096
        $region32: #{tpu_custom_call.1} parent=27 // pred_fallthru
          _
        %p137 = scmp.lt.s32.totalorder %s17, 1
        %s138 = scalar_select %p137, %s17, 1
        %s139 = smul.addr %s138, 8
        %s140 = scalar_lea.vmem %s0, %s139
        %p141 = pneg %p38
        %p142 = pneg %p35
        %p143 = pneg %p59
        %p144 = pneg %p56
        %p145 = pneg %p85
        %p146 = pneg %p82
        %s147 = sand.u32 %s72, 1
        %s148 = scalar_lea.sflag [#allocation4], %s147
        %s149 = sand.u32 %s72, 1
        %s150 = smul.addr %s149, 8
        %s151 = scalar_lea.vmem [#allocation5], %s150
        %p152 = scmp.lt.s32.totalorder %s17, 1
        %s153 = scalar_select %p152, %s17, 1
        %s154 = smul.addr %s153, 8
        %s155 = scalar_lea.vmem %s0, %s154
        %v156 = vld [vmem:[%s155] sm:$0xff]
        %v157 = vlaneseq
        %v158 = vand.u32 %v157, 127
        %v159 = vadd.s32 %v158, 128
        %v160 = vadd.s32 %v158, 256
        %v161 = vadd.s32 %v158, 384
        %162 = vset.pattern.permute.xlu0 0
        %163 = vperm.xlu0 %162, %v156
        %v164 = vpop.permute.xlu0 %163
        %vm165 = vcmp.eq.s32.totalorder %v158, %v164
        %vm166 = vcmp.eq.s32.totalorder %v159, %v164
        %vm167 = vcmp.eq.s32.totalorder %v160, %v164
        %vm168 = vcmp.eq.s32.totalorder %v161, %v164
        %v169 = vsel %vm165, 1, 0
        %v170 = vsel %vm166, 1, 0
        %v171 = vsel %vm167, 1, 0
        %v172 = vsel %vm168, 1, 0
        %v173 = vcvt.s32.f32 %v169
        %v174 = vcvt.s32.f32 %v170
        %v175 = vcvt.s32.f32 %v171
        %v176 = vcvt.s32.f32 %v172
        %v177 = vpack.c.bf16 %v174, %v173
        %v178 = vpack.c.bf16 %v176, %v175
        %v179 = vunpack.c.l.bf16 %v177
        %v180 = vunpack.c.h.bf16 %v177
        %v181 = vunpack.c.l.bf16 %v178
        %v182 = vunpack.c.h.bf16 %v178
        %v183 = vadd.f32 %v179, 0.0
        %v184 = vadd.f32 %v180, 0.0
        %v185 = vadd.f32 %v181, 0.0
        %v186 = vadd.f32 %v182, 0.0
        %v187 = vpack.c.bf16 %v184, %v183
        %v188 = vpack.c.bf16 %v186, %v185
        %189 = vset.pattern.permute.xlu0 1
        %190 = vperm.xlu0 %189, %v156
        %v191 = vpop.permute.xlu0 %190
        %vm192 = vcmp.eq.s32.totalorder %v158, %v191
        %vm193 = vcmp.eq.s32.totalorder %v159, %v191
        %vm194 = vcmp.eq.s32.totalorder %v160, %v191
        %vm195 = vcmp.eq.s32.totalorder %v161, %v191
        %v196 = vsel %vm192, 1, 0
        %v197 = vsel %vm193, 1, 0
        %v198 = vsel %vm194, 1, 0
        %v199 = vsel %vm195, 1, 0
        %v200 = vcvt.s32.f32 %v196
        %v201 = vcvt.s32.f32 %v197
        %v202 = vcvt.s32.f32 %v198
        %v203 = vcvt.s32.f32 %v199
        %v204 = vpack.c.bf16 %v201, %v200
        %v205 = vpack.c.bf16 %v203, %v202
        %v206 = vunpack.c.l.bf16 %v187
        %v207 = vunpack.c.h.bf16 %v187
        %v208 = vunpack.c.l.bf16 %v188
        %v209 = vunpack.c.h.bf16 %v188
        %v210 = vunpack.c.l.bf16 %v204
        %v211 = vunpack.c.h.bf16 %v204
        %v212 = vunpack.c.l.bf16 %v205
        %v213 = vunpack.c.h.bf16 %v205
        %v214 = vadd.f32 %v206, %v210
        %v215 = vadd.f32 %v207, %v211
        %v216 = vadd.f32 %v208, %v212
        %v217 = vadd.f32 %v209, %v213
        %v218 = vpack.c.bf16 %v215, %v214
        %v219 = vpack.c.bf16 %v217, %v216
        %220 = vset.pattern.permute.xlu0 2
        %221 = vperm.xlu0 %220, %v156
        %v222 = vpop.permute.xlu0 %221
        %vm223 = vcmp.eq.s32.totalorder %v158, %v222
        %vm224 = vcmp.eq.s32.totalorder %v159, %v222
        %vm225 = vcmp.eq.s32.totalorder %v160, %v222
        %vm226 = vcmp.eq.s32.totalorder %v161, %v222
        %v227 = vsel %vm223, 1, 0
        %v228 = vsel %vm224, 1, 0
        %v229 = vsel %vm225, 1, 0
        %v230 = vsel %vm226, 1, 0
        %v231 = vcvt.s32.f32 %v227
        %v232 = vcvt.s32.f32 %v228
        %v233 = vcvt.s32.f32 %v229
        %v234 = vcvt.s32.f32 %v230
        %v235 = vpack.c.bf16 %v232, %v231
        %v236 = vpack.c.bf16 %v234, %v233
        %v237 = vunpack.c.l.bf16 %v218
        %v238 = vunpack.c.h.bf16 %v218
        %v239 = vunpack.c.l.bf16 %v219
        %v240 = vunpack.c.h.bf16 %v219
        %v241 = vunpack.c.l.bf16 %v235
        %v242 = vunpack.c.h.bf16 %v235
        %v243 = vunpack.c.l.bf16 %v236
        %v244 = vunpack.c.h.bf16 %v236
        %v245 = vadd.f32 %v237, %v241
        %v246 = vadd.f32 %v238, %v242
        %v247 = vadd.f32 %v239, %v243
        %v248 = vadd.f32 %v240, %v244
        %v249 = vpack.c.bf16 %v246, %v245
        %v250 = vpack.c.bf16 %v248, %v247
        %251 = vset.pattern.permute.xlu0 3
        %252 = vperm.xlu0 %251, %v156
        %v253 = vpop.permute.xlu0 %252
        %vm254 = vcmp.eq.s32.totalorder %v158, %v253
        %vm255 = vcmp.eq.s32.totalorder %v159, %v253
        %vm256 = vcmp.eq.s32.totalorder %v160, %v253
        %vm257 = vcmp.eq.s32.totalorder %v161, %v253
        %v258 = vsel %vm254, 1, 0
        %v259 = vsel %vm255, 1, 0
        %v260 = vsel %vm256, 1, 0
        %v261 = vsel %vm257, 1, 0
        %v262 = vcvt.s32.f32 %v258
        %v263 = vcvt.s32.f32 %v259
        %v264 = vcvt.s32.f32 %v260
        %v265 = vcvt.s32.f32 %v261
        %v266 = vpack.c.bf16 %v263, %v262
        %v267 = vpack.c.bf16 %v265, %v264
        %v268 = vunpack.c.l.bf16 %v249
        %v269 = vunpack.c.h.bf16 %v249
        %v270 = vunpack.c.l.bf16 %v250
        %v271 = vunpack.c.h.bf16 %v250
        %v272 = vunpack.c.l.bf16 %v266
        %v273 = vunpack.c.h.bf16 %v266
        %v274 = vunpack.c.l.bf16 %v267
        %v275 = vunpack.c.h.bf16 %v267
        %v276 = vadd.f32 %v268, %v272
        %v277 = vadd.f32 %v269, %v273
        %v278 = vadd.f32 %v270, %v274
        %v279 = vadd.f32 %v271, %v275
        %v280 = vpack.c.bf16 %v276, %v276
        %v281 = vpack.c.bf16 %v277, %v277
        %v282 = vpack.c.bf16 %v278, %v278
        %v283 = vpack.c.bf16 %v279, %v279
        %v284 = vld [vmem:[#allocation2] sm:$0xf]
        %v285 = vld [vmem:[#allocation2 + $0x4] sm:$0xf]
        %v286 = vld [vmem:[#allocation2 + $0x8] sm:$0xf]
        %v287 = vld [vmem:[#allocation2 + $0xc] sm:$0xf]
        %v288 = vld [vmem:[#allocation2 + $0x10] sm:$0xf]
        %v289 = vld [vmem:[#allocation2 + $0x14] sm:$0xf]
        %v290 = vld [vmem:[#allocation2 + $0x18] sm:$0xf]
        %v291 = vld [vmem:[#allocation2 + $0x1c] sm:$0xf]
        %v292 = vld [vmem:[#allocation2 + $0x20] sm:$0xf]
        %v293 = vld [vmem:[#allocation2 + $0x24] sm:$0xf]
        %v294 = vld [vmem:[#allocation2 + $0x28] sm:$0xf]
        %v295 = vld [vmem:[#allocation2 + $0x2c] sm:$0xf]
        %v296 = vld [vmem:[#allocation2 + $0x30] sm:$0xf]
        %v297 = vld [vmem:[#allocation2 + $0x34] sm:$0xf]
        %v298 = vld [vmem:[#allocation2 + $0x38] sm:$0xf]
        %v299 = vld [vmem:[#allocation2 + $0x3c] sm:$0xf]
        %v300 = vld [vmem:[#allocation2 + $0x40] sm:$0xf]
        %v301 = vld [vmem:[#allocation2 + $0x44] sm:$0xf]
        %v302 = vld [vmem:[#allocation2 + $0x48] sm:$0xf]
        %v303 = vld [vmem:[#allocation2 + $0x4c] sm:$0xf]
        %v304 = vld [vmem:[#allocation2 + $0x50] sm:$0xf]
        %v305 = vld [vmem:[#allocation2 + $0x54] sm:$0xf]
        %v306 = vld [vmem:[#allocation2 + $0x58] sm:$0xf]
        %v307 = vld [vmem:[#allocation2 + $0x5c] sm:$0xf]
        %v308 = vld [vmem:[#allocation2 + $0x60] sm:$0xf]
        %v309 = vld [vmem:[#allocation2 + $0x64] sm:$0xf]
        %v310 = vld [vmem:[#allocation2 + $0x68] sm:$0xf]
        %v311 = vld [vmem:[#allocation2 + $0x6c] sm:$0xf]
        %v312 = vld [vmem:[#allocation2 + $0x70] sm:$0xf]
        %v313 = vld [vmem:[#allocation2 + $0x74] sm:$0xf]
        %v314 = vld [vmem:[#allocation2 + $0x78] sm:$0xf]
        %v315 = vld [vmem:[#allocation2 + $0x7c] sm:$0xf]
        %v316 = vld [vmem:[#allocation2 + $0x80] sm:$0xf]
        %v317 = vld [vmem:[#allocation2 + $0x84] sm:$0xf]
        %v318 = vld [vmem:[#allocation2 + $0x88] sm:$0xf]
        %v319 = vld [vmem:[#allocation2 + $0x8c] sm:$0xf]
        %v320 = vld [vmem:[#allocation2 + $0x90] sm:$0xf]
        %v321 = vld [vmem:[#allocation2 + $0x94] sm:$0xf]
        %v322 = vld [vmem:[#allocation2 + $0x98] sm:$0xf]
        %v323 = vld [vmem:[#allocation2 + $0x9c] sm:$0xf]
        %v324 = vld [vmem:[#allocation2 + $0xa0] sm:$0xf]
        %v325 = vld [vmem:[#allocation2 + $0xa4] sm:$0xf]
        %v326 = vld [vmem:[#allocation2 + $0xa8] sm:$0xf]
        %v327 = vld [vmem:[#allocation2 + $0xac] sm:$0xf]
        %v328 = vld [vmem:[#allocation2 + $0xb0] sm:$0xf]
        %v329 = vld [vmem:[#allocation2 + $0xb4] sm:$0xf]
        %v330 = vld [vmem:[#allocation2 + $0xb8] sm:$0xf]
        %v331 = vld [vmem:[#allocation2 + $0xbc] sm:$0xf]
        %v332 = vld [vmem:[#allocation2 + $0xc0] sm:$0xf]
        %v333 = vld [vmem:[#allocation2 + $0xc4] sm:$0xf]
        %v334 = vld [vmem:[#allocation2 + $0xc8] sm:$0xf]
        %v335 = vld [vmem:[#allocation2 + $0xcc] sm:$0xf]
        %v336 = vld [vmem:[#allocation2 + $0xd0] sm:$0xf]
        %v337 = vld [vmem:[#allocation2 + $0xd4] sm:$0xf]
        %v338 = vld [vmem:[#allocation2 + $0xd8] sm:$0xf]
        %v339 = vld [vmem:[#allocation2 + $0xdc] sm:$0xf]
        %v340 = vld [vmem:[#allocation2 + $0xe0] sm:$0xf]
        %v341 = vld [vmem:[#allocation2 + $0xe4] sm:$0xf]
        %v342 = vld [vmem:[#allocation2 + $0xe8] sm:$0xf]
        %v343 = vld [vmem:[#allocation2 + $0xec] sm:$0xf]
        %v344 = vld [vmem:[#allocation2 + $0xf0] sm:$0xf]
        %v345 = vld [vmem:[#allocation2 + $0xf4] sm:$0xf]
        %v346 = vld [vmem:[#allocation2 + $0xf8] sm:$0xf]
        %v347 = vld [vmem:[#allocation2 + $0xfc] sm:$0xf]
        %v412 = vunpack.c.l.b16 %v284
        %v413 = vunpack.c.l.b16 %v285
        %v414 = vunpack.c.l.b16 %v286
        %v415 = vunpack.c.l.b16 %v287
        %v416 = vunpack.c.l.b16 %v288
        %v417 = vunpack.c.l.b16 %v289
        %v418 = vunpack.c.l.b16 %v290
        %v419 = vunpack.c.l.b16 %v291
        %v420 = vunpack.c.l.b16 %v292
        %v421 = vunpack.c.l.b16 %v293
        %v422 = vunpack.c.l.b16 %v294
        %v423 = vunpack.c.l.b16 %v295
        %v424 = vunpack.c.l.b16 %v296
        %v425 = vunpack.c.l.b16 %v297
        %v426 = vunpack.c.l.b16 %v298
        %v427 = vunpack.c.l.b16 %v299
        %v428 = vunpack.c.l.b16 %v300
        %v429 = vunpack.c.l.b16 %v301
        %v430 = vunpack.c.l.b16 %v302
        %v431 = vunpack.c.l.b16 %v303
        %v432 = vunpack.c.l.b16 %v304
        %v433 = vunpack.c.l.b16 %v305
        %v434 = vunpack.c.l.b16 %v306
        %v435 = vunpack.c.l.b16 %v307
        %v436 = vunpack.c.l.b16 %v308
        %v437 = vunpack.c.l.b16 %v309
        %v438 = vunpack.c.l.b16 %v310
        %v439 = vunpack.c.l.b16 %v311
        %v440 = vunpack.c.l.b16 %v312
        %v441 = vunpack.c.l.b16 %v313
        %v442 = vunpack.c.l.b16 %v314
        %v443 = vunpack.c.l.b16 %v315
        %v444 = vunpack.c.l.b16 %v316
        %v445 = vunpack.c.l.b16 %v317
        %v446 = vunpack.c.l.b16 %v318
        %v447 = vunpack.c.l.b16 %v319
        %v448 = vunpack.c.l.b16 %v320
        %v449 = vunpack.c.l.b16 %v321
        %v450 = vunpack.c.l.b16 %v322
        %v451 = vunpack.c.l.b16 %v323
        %v452 = vunpack.c.l.b16 %v324
        %v453 = vunpack.c.l.b16 %v325
        %v454 = vunpack.c.l.b16 %v326
        %v455 = vunpack.c.l.b16 %v327
        %v456 = vunpack.c.l.b16 %v328
        %v457 = vunpack.c.l.b16 %v329
        %v458 = vunpack.c.l.b16 %v330
        %v459 = vunpack.c.l.b16 %v331
        %v460 = vunpack.c.l.b16 %v332
        %v461 = vunpack.c.l.b16 %v333
        %v462 = vunpack.c.l.b16 %v334
        %v463 = vunpack.c.l.b16 %v335
        %v464 = vunpack.c.l.b16 %v336
        %v465 = vunpack.c.l.b16 %v337
        %v466 = vunpack.c.l.b16 %v338
        %v467 = vunpack.c.l.b16 %v339
        %v468 = vunpack.c.l.b16 %v340
        %v469 = vunpack.c.l.b16 %v341
        %v470 = vunpack.c.l.b16 %v342
        %v471 = vunpack.c.l.b16 %v343
        %v472 = vunpack.c.l.b16 %v344
        %v473 = vunpack.c.l.b16 %v345
        %v474 = vunpack.c.l.b16 %v346
        %v475 = vunpack.c.l.b16 %v347
        %v476 = vpack.c.b16 %v413, %v412
        %v477 = vpack.c.b16 %v415, %v414
        %v478 = vpack.c.b16 %v417, %v416
        %v479 = vpack.c.b16 %v419, %v418
        %v480 = vpack.c.b16 %v421, %v420
        %v481 = vpack.c.b16 %v423, %v422
        %v482 = vpack.c.b16 %v425, %v424
        %v483 = vpack.c.b16 %v427, %v426
        %v484 = vpack.c.b16 %v429, %v428
        %v485 = vpack.c.b16 %v431, %v430
        %v486 = vpack.c.b16 %v433, %v432
        %v487 = vpack.c.b16 %v435, %v434
        %v488 = vpack.c.b16 %v437, %v436
        %v489 = vpack.c.b16 %v439, %v438
        %v490 = vpack.c.b16 %v441, %v440
        %v491 = vpack.c.b16 %v443, %v442
        %v492 = vpack.c.b16 %v445, %v444
        %v493 = vpack.c.b16 %v447, %v446
        %v494 = vpack.c.b16 %v449, %v448
        %v495 = vpack.c.b16 %v451, %v450
        %v496 = vpack.c.b16 %v453, %v452
        %v497 = vpack.c.b16 %v455, %v454
        %v498 = vpack.c.b16 %v457, %v456
        %v499 = vpack.c.b16 %v459, %v458
        %v500 = vpack.c.b16 %v461, %v460
        %v501 = vpack.c.b16 %v463, %v462
        %v502 = vpack.c.b16 %v465, %v464
        %v503 = vpack.c.b16 %v467, %v466
        %v504 = vpack.c.b16 %v469, %v468
        %v505 = vpack.c.b16 %v471, %v470
        %v506 = vpack.c.b16 %v473, %v472
        %v507 = vpack.c.b16 %v475, %v474
        %540 = vmatpush.bf16.msra.mxu0 %v483
        %541 = vmatpush.bf16.msra.mxu0 %v482
        %542 = vmatpush.bf16.msra.mxu0 %v481
        %543 = vmatpush.bf16.msra.mxu0 %v480
        %544 = vmatpush.bf16.msra.mxu0 %v479
        %545 = vmatpush.bf16.msra.mxu0 %v478
        %546 = vmatpush.bf16.msra.mxu0 %v477
        %547 = vmatpush.bf16.msra.mxu0 %v476
        %548 = vmatmul.bf16.gmra.mxu0 %v280
        %v549 = vpop.f32.mrf.mxu0
        %v550 = vadd.f32 0.0, %v549
        %v551 = vpop.f32.mrf.mxu0
        %552 = vdwg.mxu0
        %553 = vmatpush.bf16.msra.mxu0 %v491
        %554 = vmatpush.bf16.msra.mxu0 %v490
        %555 = vmatpush.bf16.msra.mxu0 %v489
        %556 = vmatpush.bf16.msra.mxu0 %v488
        %557 = vmatpush.bf16.msra.mxu0 %v487
        %558 = vmatpush.bf16.msra.mxu0 %v486
        %559 = vmatpush.bf16.msra.mxu0 %v485
        %560 = vmatpush.bf16.msra.mxu0 %v484
        %561 = vmatmul.bf16.gmra.mxu0 %v281
        %v562 = vpop.f32.mrf.mxu0
        %v563 = vadd.f32 %v550, %v562
        %v564 = vpop.f32.mrf.mxu0
        %565 = vdwg.mxu0
        %566 = vmatpush.bf16.msra.mxu0 %v499
        %567 = vmatpush.bf16.msra.mxu0 %v498
        %568 = vmatpush.bf16.msra.mxu0 %v497
        %569 = vmatpush.bf16.msra.mxu0 %v496
        %570 = vmatpush.bf16.msra.mxu0 %v495
        %571 = vmatpush.bf16.msra.mxu0 %v494
        %572 = vmatpush.bf16.msra.mxu0 %v493
        %573 = vmatpush.bf16.msra.mxu0 %v492
        %574 = vmatmul.bf16.gmra.mxu0 %v282
        %v575 = vpop.f32.mrf.mxu0
        %v576 = vadd.f32 %v563, %v575
        %v577 = vpop.f32.mrf.mxu0
        %578 = vdwg.mxu0
        %579 = vmatpush.bf16.msra.mxu0 %v507
        %580 = vmatpush.bf16.msra.mxu0 %v506
        %581 = vmatpush.bf16.msra.mxu0 %v505
        %582 = vmatpush.bf16.msra.mxu0 %v504
        %583 = vmatpush.bf16.msra.mxu0 %v503
        %584 = vmatpush.bf16.msra.mxu0 %v502
        %585 = vmatpush.bf16.msra.mxu0 %v501
        %586 = vmatpush.bf16.msra.mxu0 %v500
        %587 = vmatmul.bf16.gmra.mxu0 %v283
        %v588 = vpop.f32.mrf.mxu0
        %v589 = vadd.f32 %v576, %v588
        %v590 = vpop.f32.mrf.mxu0
        %591 = vdwg.mxu0
        %592 = vst [vmem:[%s151] sm:$0xff] %v589
        %s593 = sand.u32 %s72, 1
        %s594 = scalar_lea.sflag [#allocation4], %s593
        %s595 = sand.u32 %s72, 1
        %s596 = smul.addr %s595, 8
        %s597 = scalar_lea.vmem [#allocation5], %s596
        // Predicated region
        $region33: #{tpu_custom_call.1} parent=27 // pred_check
          %p598 = pneg %p82
        $region34: #{tpu_custom_call.1} parent=27 // pred_check_branch
          %600 = sbr.rel (%p598) target = $region36
        $region35: #{tpu_custom_call.1} parent=27 // pred_region
          %602 = vsyncadd %s594, 0
          %s603 = smul.addr %s17, 8
          %s604 = scalar_lea.hbm %s2, %s603
          %s606 = sshll.u32 %s597, 4
          %s607 = int_to_ptr.vmem [resolvable:$true] %s606
          %s608 = sshll.u32 %s604, 4
          %s609 = int_to_ptr.hbm [resolvable:$true] %s608
          %611 = dma.vmem_to_hbm [thread:$0]  %s607, 128, %s609, %s594
        $region36: #{tpu_custom_call.1} parent=27 // pred_fallthru
          _
      $region28: #{tpu_custom_call.1} parent=5 // pred_fallthru
        _
      %p612 = scmp.le.s32.totalorder 2, %s12
      // Predicated region
      $region37: #{tpu_custom_call.1} parent=5 // pred_check
        %p613 = pneg %p612
      $region38: #{tpu_custom_call.1} parent=5 // pred_check_branch
        %615 = sbr.rel (%p613) target = $region40
      $region39: #{tpu_custom_call.1} parent=5 // pred_region
        %s616 = ssub.s32 %s12, 2
        // Predicated region
        $region41: #{tpu_custom_call.1} parent=39 // pred_check
          %p617 = pneg %p88
        $region42: #{tpu_custom_call.1} parent=39 // pred_check_branch
          %619 = sbr.rel (%p617) target = $region44
        $region43: #{tpu_custom_call.1} parent=39 // pred_region
          %s620 = sand.u32 %s73, 1
          %s621 = scalar_lea.sflag [#allocation4], %s620
          %s622 = sand.u32 %s73, 1
          %s623 = smul.addr %s622, 8
          %s624 = scalar_lea.vmem [#allocation5], %s623
          %626 = dma.done %s621, 128
        $region44: #{tpu_custom_call.1} parent=39 // pred_fallthru
          _
      $region40: #{tpu_custom_call.1} parent=5 // pred_fallthru
        _
    $region6: #{tpu_custom_call.1} parent=1 // loop_footer
      %s16 = sadd.s32 1, %s12
    $region7: #{tpu_custom_call.1} parent=1 // loop_footer_branch
      %11 = sbr.rel target = $region3
    $region8: #{tpu_custom_call.1} parent=1 // loop_exit
      _
    %627 = vsyncpa [#allocation3], 1
    %s628 = scalar_lea.sflag [#allocation3], 1
    %629 = vsyncpa %s628, 1
    %630 = vsyncpa [#allocation4], 1
    %s631 = scalar_lea.sflag [#allocation4], 1
    %632 = vsyncpa %s631, 1

</llo_original>
